<compile_context>
chip_gen: v7x
topology: tpu7x:2x2x1
jax: 0.10.0
libtpu: 0.0.40
codegen_flags: <defaults>
</compile_context>

<pallas_src>
import math
from functools import partial

import jax
import jax.numpy as jnp
from jax.experimental import pallas as pl
from jax.experimental.pallas import tpu as pltpu

LANE = 128      # lane width: last-dim alignment for vregs / MXU tiles

# MXU operand dtype.  f32 keeps the 1e-5 self-test exact for the toy backbone.
# For real backbone sizes on v6e/v7x set jnp.bfloat16: weights are pre-cast
# once in prepare_padded_params, only MXU operands are cast in the kernel,
# accumulation stays f32 via preferred_element_type (loosen tolerances).
MXU_DTYPE = jnp.float32


def _round_up(v, m):
    return ((v + m - 1) // m) * m


def _device_kind():
    try:
        return jax.devices()[0].device_kind.lower()
    except Exception:
        return "tpu"


_KIND = _device_kind()
# v5e MXU is 4x128^2: batch tiles beyond 128 buy no extra MXU fill there.
_TILE_CAP = 128 if "v5" in _KIND else 256
# v7x has 2 TensorCores per chip: keep >=2 batch blocks so "parallel" shards.
_TWO_BLOCKS = "v7" in _KIND


def _pick_b_tile(b):
    """Largest (8-multiple) batch tile bounded by the chip's MXU height and,
    on v7x, by half the padded batch so both TensorCores get work."""
    b8 = _round_up(b, 8)
    tile = min(_TILE_CAP, b8)
    if _TWO_BLOCKS and b8 >= 16:
        tile = min(tile, _round_up(b8 // 2, 8))
    return max(8, tile)


# ---------------------------------------------------------------------------
# Parameter init (unpadded, synthetic backbone) + one-time padding/fusion.
# ---------------------------------------------------------------------------
def init_params(key, feat, state_dim, goal_dim, hidden):
    ks = jax.random.split(key, 7)
    sc = 0.1
    w1a = sc * jax.random.normal(ks[0], (feat, hidden), jnp.float32)
    w1b = sc * jax.random.normal(ks[1], (state_dim, hidden), jnp.float32)
    w1c = sc * jax.random.normal(ks[2], (goal_dim, hidden), jnp.float32)
    w1t = sc * jax.random.normal(ks[3], (1, hidden), jnp.float32)
    b1 = jnp.zeros((1, hidden), jnp.float32)
    w2 = sc * jax.random.normal(ks[4], (hidden, feat), jnp.float32)
    b2 = jnp.zeros((1, feat), jnp.float32)
    return (w1a, w1b, w1c, w1t, b1, w2, b2)


def prepare_padded_params(params, feat, state_dim, goal_dim, hidden):
    """Pad/fuse ONCE outside the per-step path.

    W1 is kept as two MXU operands (no in-kernel lane concat needed):
      w1z_p : (feat_p, hid_p)  acts on zt
      w1x_p : (auxd_p, hid_p)  acts on aux = [state | goal | t | 1]
              rows = [w1b; w1c; w1t; b1]  (layer bias rides the ones lane)
    Matmul operands are pre-cast to MXU_DTYPE here (no per-step weight casts).
    """
    w1a, w1b, w1c, w1t, b1, w2, b2 = params
    feat_p = _round_up(feat, LANE)
    auxd_p = _round_up(state_dim + goal_dim + 2, LANE)
    hid_p = _round_up(hidden, LANE)

    w1z_p = jnp.zeros((feat_p, hid_p), jnp.float32).at[:feat, :hidden].set(w1a)

    w1x_p = jnp.zeros((auxd_p, hid_p), jnp.float32)
    off = 0
    w1x_p = w1x_p.at[off:off + state_dim, :hidden].set(w1b); off += state_dim
    w1x_p = w1x_p.at[off:off + goal_dim, :hidden].set(w1c); off += goal_dim
    w1x_p = w1x_p.at[off:off + 1, :hidden].set(w1t); off += 1
    w1x_p = w1x_p.at[off:off + 1, :hidden].set(b1)        # bias via ones lane

    w2_p = jnp.zeros((hid_p, feat_p), jnp.float32).at[:hidden, :feat].set(w2)
    b2_p = jnp.zeros((1, feat_p), jnp.float32).at[:, :feat].set(b2)
    return (w1z_p.astype(MXU_DTYPE), w1x_p.astype(MXU_DTYPE),
            w2_p.astype(MXU_DTYPE), b2_p)


# ---------------------------------------------------------------------------
# Jitted forward: RNG, (conditional) padding, Pallas kernel, batch-mean loss.
# ---------------------------------------------------------------------------
@partial(jax.jit, static_argnames=("ln",))
def rf_forward(x, state, latent_goal, padded_params, key, ln=False):
    """Mirrors RF.forward. Returns (mean_loss, batchwise_mse, t, z1, vtheta)."""
    w1z_p, w1x_p, w2_p, b2_p = padded_params
    b = x.shape[0]
    feat = math.prod(x.shape[1:])
    s_dim = state.shape[1]
    g_dim = latent_goal.shape[1]
    aux_dim = s_dim + g_dim + 2
    t_lane = s_dim + g_dim                      # column of t inside aux

    feat_p = _round_up(feat, LANE)
    auxd_p = _round_up(aux_dim, LANE)
    hid_p = w1z_p.shape[1]
    assert w1z_p.shape == (feat_p, hid_p)
    assert w1x_p.shape == (auxd_p, hid_p)
    assert w2_p.shape == (hid_p, feat_p) and b2_p.shape == (1, feat_p)

    b_tile = _pick_b_tile(b)
    b_p = _round_up(b, b_tile)

    k_t, k_z = jax.random.split(key)
    if ln:
        t = jax.nn.sigmoid(jax.random.normal(k_t, (b,), jnp.float32))
    else:
        t = jax.random.uniform(k_t, (b,), jnp.float32)
    # TODO(synk): z1 could be drawn in-kernel (pltpu.prng_seed +
    # pltpu.stateful_normal) to remove one (b, feat) HBM round trip, but that
    # changes the RNG stream vs jax.random, so it is kept wrapper-side here.
    z1 = jax.random.normal(k_z, x.shape, jnp.float32)

    f32 = jnp.float32
    x_flat = x.reshape(b, feat).astype(f32)
    z1_flat = z1.reshape(b, feat).astype(f32)
    aux = jnp.concatenate(
        [state.astype(f32), latent_goal.astype(f32), t[:, None],
         jnp.ones((b, 1), f32)], axis=1)                       # (b, S+G+2)

    def pad2(a, rows, cols):
        r, c = a.shape
        if r == rows and c == cols:
            return a                                           # skip pad pass
        return jnp.pad(a, ((0, rows - r), (0, cols - c)))

    x_p = pad2(x_flat, b_p, feat_p)
    z1_p = pad2(z1_flat, b_p, feat_p)
    aux_p = pad2(aux, b_p, auxd_p)

    inv_feat = 1.0 / float(feat)

    def kernel(x_ref, z1_ref, aux_ref, w1z_ref, w1x_ref, w2_ref, b2_ref,
               mse_ref, vtheta_ref):
        xb = x_ref[...]                          # (b_tile, feat_p) f32
        d = z1_ref[...] - xb                     # reused: interp + residual
        t_col = aux_ref[:, t_lane:t_lane + 1]    # t read from its aux lane
        zt = xb + t_col * d                      # == (1 - t) * x + t * z1
        # Two MXU pushes accumulated in f32 — no lane-concat VMEM copy.
        h = jnp.dot(zt.astype(MXU_DTYPE), w1z_ref[...],
                    preferred_element_type=jnp.float32)
        h = h + jnp.dot(aux_ref[...].astype(MXU_DTYPE), w1x_ref[...],
                        preferred_element_type=jnp.float32)
        h = jnp.tanh(h)                          # EUP
        vtheta = jnp.dot(h.astype(MXU_DTYPE), w2_ref[...],
                         preferred_element_type=jnp.float32) + b2_ref[...]
        vtheta_ref[...] = vtheta                 # lane-dense (feat_p=128k) store
        diff = d - vtheta
        # Padded feature columns are exactly zero, so sum/feat == true mean.
        mse_ref[...] = jnp.sum(diff * diff, axis=-1, keepdims=True) * inv_feat

    # VMEM budget derived from actual block footprint (activations are
    # double-buffered by the pipeline; weights single-buffered).
    wsz = jnp.dtype(MXU_DTYPE).itemsize
    act_block_bytes = 4 * (b_tile * feat_p * 3 + b_tile * auxd_p + b_tile)
    wgt_bytes = (wsz * (feat_p * hid_p + auxd_p * hid_p + hid_p * feat_p)
                 + 4 * feat_p)
    vmem_needed = 2 * act_block_bytes + wgt_bytes
    vmem_limit = int(min(max(32 << 20, 2 * vmem_needed), 100 << 20))
    # TODO(synk): for real backbone sizes where W1/W2 exceed the VMEM budget
    # (esp. v7x's 64 MiB/TC), add a grid axis over hid_p or feat_p
    # ("arbitrary" + f32 accumulator scratch) instead of shrinking b_tile.

    flops = 2 * b_p * hid_p * (feat_p + auxd_p) + 2 * b_p * hid_p * feat_p
    bytes_acc = (4 * (2 * b_p * feat_p + b_p * auxd_p)      # inputs
                 + wgt_bytes                                 # weights
                 + 4 * (b_p * feat_p + b_p))                 # outputs

    mse_pad, vtheta_pad = pl.pallas_call(
        kernel,
        out_shape=(jax.ShapeDtypeStruct((b_p, 1), f32),
                   jax.ShapeDtypeStruct((b_p, feat_p), f32)),
        grid=(b_p // b_tile,),
        in_specs=[
            pl.BlockSpec((b_tile, feat_p), lambda i: (i, 0)),       # x
            pl.BlockSpec((b_tile, feat_p), lambda i: (i, 0)),       # z1
            pl.BlockSpec((b_tile, auxd_p), lambda i: (i, 0)),       # aux
            # Constant weight blocks: single buffer (no pointless 2x VMEM).
            pl.BlockSpec((feat_p, hid_p), lambda i: (0, 0),
                         pipeline_mode=pl.Buffered(1)),             # W1 (zt)
            pl.BlockSpec((auxd_p, hid_p), lambda i: (0, 0),
                         pipeline_mode=pl.Buffered(1)),             # W1 (aux)
            pl.BlockSpec((hid_p, feat_p), lambda i: (0, 0),
                         pipeline_mode=pl.Buffered(1)),             # W2
            pl.BlockSpec((1, feat_p), lambda i: (0, 0),
                         pipeline_mode=pl.Buffered(1)),             # b2
        ],
        out_specs=(
            pl.BlockSpec((b_tile, 1), lambda i: (i, 0)),            # mse
            pl.BlockSpec((b_tile, feat_p), lambda i: (i, 0)),       # vtheta
        ),
        compiler_params=pltpu.CompilerParams(
            dimension_semantics=("parallel",),
            vmem_limit_bytes=vmem_limit),
        cost_estimate=pl.CostEstimate(
            flops=flops, transcendentals=b_p * hid_p,
            bytes_accessed=bytes_acc),
    )(x_p, z1_p, aux_p, w1z_p, w1x_p, w2_p, b2_p)

    batchwise_mse = mse_pad[:b, 0]
    mean_loss = jnp.mean(batchwise_mse)
    if b_p == b and feat_p == feat:
        vtheta = vtheta_pad                                  # skip de-pad slice
    else:
        vtheta = vtheta_pad[:b, :feat]
    return mean_loss, batchwise_mse, t, z1, vtheta


def make_ttloss(t, batchwise_mse):
    """Host sync for logging — call sparingly, NOT every training step."""
    tv = jax.device_get(t).reshape(-1).tolist()
    lv = jax.device_get(batchwise_mse).reshape(-1).tolist()
    return list(zip(tv, lv))


# ---------------------------------------------------------------------------
# Self-test against a pure-JAX reference (same t, z1, params).
# ---------------------------------------------------------------------------
if __name__ == "__main__":
    B, T, A = 2, 8, 4          # actions x: (batch, seq, act_dim)
    S, G, H = 8, 16, 32        # state dim, latent goal dim, backbone hidden
    FEAT = T * A

    root = jax.random.PRNGKey(0)
    k_x, k_s, k_g, k_p, k_fwd = jax.random.split(root, 5)

    x = jax.random.normal(k_x, (B, T, A), jnp.float32)
    state = jax.random.normal(k_s, (B, S), jnp.float32)
    latent_goal = jax.random.normal(k_g, (B, G), jnp.float32)

    params = init_params(k_p, FEAT, S, G, H)
    padded_params = prepare_padded_params(params, FEAT, S, G, H)

    mean_loss, batchwise_mse, t, z1, vtheta = rf_forward(
        x, state, latent_goal, padded_params, k_fwd, ln=False)
    jax.block_until_ready(mean_loss)

    # ttloss built from device arrays once, outside the hot path.
    ttloss = make_ttloss(t, batchwise_mse)

    # Pure-JAX reference check (same t, z1, unpadded params).
    w1a, w1b, w1c, w1t, b1, w2, b2 = params
    texp = t.reshape(B, 1, 1)
    zt = (1.0 - texp) * x + texp * z1
    zt_f = zt.reshape(B, FEAT)
    h = jnp.tanh(zt_f @ w1a + state @ w1b + latent_goal @ w1c
                 + t.reshape(B, 1) * w1t + b1)
    vtheta_ref = h @ w2 + b2
    diff = z1.reshape(B, FEAT) - x.reshape(B, FEAT) - vtheta_ref
    ref_mse = jnp.mean(diff * diff, axis=-1)
    ref_mean = jnp.mean(ref_mse)

    assert jnp.allclose(vtheta, vtheta_ref, atol=1e-5, rtol=1e-5)
    assert jnp.allclose(batchwise_mse, ref_mse, atol=1e-5, rtol=1e-5)
    assert jnp.allclose(mean_loss, ref_mean, atol=1e-5, rtol=1e-5)
    assert len(ttloss) == B

    print("KERNEL_OK")
</pallas_src>

<mosaic_0001>
module attributes {stable_mosaic.version = 11 : i64} {
  func.func @kernel(%arg0: i32, %arg1: memref<8x128xf32, #tpu.memory_space<vmem>>, %arg2: memref<8x128xf32, #tpu.memory_space<vmem>>, %arg3: memref<8x128xf32, #tpu.memory_space<vmem>>, %arg4: memref<128x128xf32, #tpu.memory_space<vmem>>, %arg5: memref<128x128xf32, #tpu.memory_space<vmem>>, %arg6: memref<128x128xf32, #tpu.memory_space<vmem>>, %arg7: memref<1x128xf32, #tpu.memory_space<vmem>>, %arg8: memref<8x1xf32, #tpu.memory_space<vmem>>, %arg9: memref<8x128xf32, #tpu.memory_space<vmem>>) attributes {dimension_semantics = [#tpu.dimension_semantics<parallel>], iteration_bounds = array<i64: 1>, scalar_prefetch = 0 : i64, scratch_operands = 0 : i64, tpu.core_type = #tpu.core_type<tc>, window_params = [{transform_indices = @transform_0, window_bounds = array<i64: 8, 128>}, {transform_indices = @transform_1, window_bounds = array<i64: 8, 128>}, {transform_indices = @transform_2, window_bounds = array<i64: 8, 128>}, {pipeline_mode = #tpu.pipeline_mode<synchronous>, transform_indices = @transform_3, window_bounds = array<i64: 128, 128>}, {pipeline_mode = #tpu.pipeline_mode<synchronous>, transform_indices = @transform_4, window_bounds = array<i64: 128, 128>}, {pipeline_mode = #tpu.pipeline_mode<synchronous>, transform_indices = @transform_5, window_bounds = array<i64: 128, 128>}, {pipeline_mode = #tpu.pipeline_mode<synchronous>, transform_indices = @transform_6, window_bounds = array<i64: 1, 128>}, {transform_indices = @transform_7, window_bounds = array<i64: 8, 1>}, {transform_indices = @transform_8, window_bounds = array<i64: 8, 128>}]} {
    %c0 = arith.constant 0 : index
    %c0_0 = arith.constant 0 : index
    %0 = vector.load %arg1[%c0, %c0_0] : memref<8x128xf32, #tpu.memory_space<vmem>>, vector<8x128xf32>
    %c0_1 = arith.constant 0 : index
    %c0_2 = arith.constant 0 : index
    %1 = vector.load %arg2[%c0_1, %c0_2] : memref<8x128xf32, #tpu.memory_space<vmem>>, vector<8x128xf32>
    %2 = arith.subf %1, %0 : vector<8x128xf32>
    %c0_3 = arith.constant 0 : index
    %c24 = arith.constant 24 : index
    %3 = vector.load %arg3[%c0_3, %c24] : memref<8x128xf32, #tpu.memory_space<vmem>>, vector<8x1xf32>
    %4 = vector.broadcast %3 : vector<8x1xf32> to vector<8x128xf32>
    %5 = arith.mulf %4, %2 : vector<8x128xf32>
    %6 = arith.addf %0, %5 : vector<8x128xf32>
    %c0_4 = arith.constant 0 : index
    %c0_5 = arith.constant 0 : index
    %7 = vector.load %arg4[%c0_4, %c0_5] : memref<128x128xf32, #tpu.memory_space<vmem>>, vector<128x128xf32>
    %cst = arith.constant dense<0.000000e+00> : vector<8x128xf32>
    %8 = tpu.matmul %6, %7, %cst {dimension_numbers = #tpu.dot_dimension_numbers<[1], [0], [0], [1], [0, 0, 1, 1], [], []>} : vector<8x128xf32>, vector<128x128xf32>, vector<8x128xf32> -> vector<8x128xf32>
    %c0_6 = arith.constant 0 : index
    %c0_7 = arith.constant 0 : index
    %9 = vector.load %arg3[%c0_6, %c0_7] : memref<8x128xf32, #tpu.memory_space<vmem>>, vector<8x128xf32>
    %c0_8 = arith.constant 0 : index
    %c0_9 = arith.constant 0 : index
    %10 = vector.load %arg5[%c0_8, %c0_9] : memref<128x128xf32, #tpu.memory_space<vmem>>, vector<128x128xf32>
    %cst_10 = arith.constant dense<0.000000e+00> : vector<8x128xf32>
    %11 = tpu.matmul %9, %10, %cst_10 {dimension_numbers = #tpu.dot_dimension_numbers<[1], [0], [0], [1], [0, 0, 1, 1], [], []>} : vector<8x128xf32>, vector<128x128xf32>, vector<8x128xf32> -> vector<8x128xf32>
    %12 = arith.addf %8, %11 : vector<8x128xf32>
    %13 = math.tanh %12 : vector<8x128xf32>
    %c0_11 = arith.constant 0 : index
    %c0_12 = arith.constant 0 : index
    %14 = vector.load %arg6[%c0_11, %c0_12] : memref<128x128xf32, #tpu.memory_space<vmem>>, vector<128x128xf32>
    %cst_13 = arith.constant dense<0.000000e+00> : vector<8x128xf32>
    %15 = tpu.matmul %13, %14, %cst_13 {dimension_numbers = #tpu.dot_dimension_numbers<[1], [0], [0], [1], [0, 0, 1, 1], [], []>} : vector<8x128xf32>, vector<128x128xf32>, vector<8x128xf32> -> vector<8x128xf32>
    %c0_14 = arith.constant 0 : index
    %c0_15 = arith.constant 0 : index
    %16 = vector.load %arg7[%c0_14, %c0_15] : memref<1x128xf32, #tpu.memory_space<vmem>>, vector<1x128xf32>
    %17 = vector.broadcast %16 : vector<1x128xf32> to vector<8x128xf32>
    %18 = arith.addf %15, %17 : vector<8x128xf32>
    %c0_16 = arith.constant 0 : index
    %c0_17 = arith.constant 0 : index
    %19 = vector.load %arg9[%c0_16, %c0_17] : memref<8x128xf32, #tpu.memory_space<vmem>>, vector<8x128xf32>
    tpu.vector_store %arg9[%c0_16, %c0_17], %18 {strides = array<i32>} : memref<8x128xf32, #tpu.memory_space<vmem>>, vector<8x128xf32>,
    %20 = arith.subf %2, %18 : vector<8x128xf32>
    %21 = arith.mulf %20, %20 : vector<8x128xf32>
    %cst_18 = arith.constant dense<0.000000e+00> : vector<8xf32>
    %22 = vector.multi_reduction <add>, %21, %cst_18 [1] : vector<8x128xf32> to vector<8xf32>
    %23 = vector.shape_cast %22 : vector<8xf32> to vector<8x1xf32>
    %cst_19 = arith.constant 3.125000e-02 : f32
    %24 = vector.broadcast %cst_19 : f32 to vector<8x1xf32>
    %25 = arith.mulf %23, %24 : vector<8x1xf32>
    %c0_20 = arith.constant 0 : index
    %c0_21 = arith.constant 0 : index
    %26 = vector.load %arg8[%c0_20, %c0_21] : memref<8x1xf32, #tpu.memory_space<vmem>>, vector<8x1xf32>
    tpu.vector_store %arg8[%c0_20, %c0_21], %25 {strides = array<i32>} : memref<8x1xf32, #tpu.memory_space<vmem>>, vector<8x1xf32>,
    return
  }
  func.func @transform_0(%arg0: i32) -> (i32, i32) {
    %c0_i32 = arith.constant 0 : i32
    %c0_i32_0 = arith.constant 0 : i32
    return %arg0, %c0_i32 : i32, i32
  }
  func.func @transform_1(%arg0: i32) -> (i32, i32) {
    %c0_i32 = arith.constant 0 : i32
    %c0_i32_0 = arith.constant 0 : i32
    return %arg0, %c0_i32 : i32, i32
  }
  func.func @transform_2(%arg0: i32) -> (i32, i32) {
    %c0_i32 = arith.constant 0 : i32
    %c0_i32_0 = arith.constant 0 : i32
    return %arg0, %c0_i32 : i32, i32
  }
  func.func @transform_3(%arg0: i32) -> (i32, i32) {
    %c0_i32 = arith.constant 0 : i32
    %c0_i32_0 = arith.constant 0 : i32
    %c0_i32_1 = arith.constant 0 : i32
    return %c0_i32, %c0_i32_0 : i32, i32
  }
  func.func @transform_4(%arg0: i32) -> (i32, i32) {
    %c0_i32 = arith.constant 0 : i32
    %c0_i32_0 = arith.constant 0 : i32
    %c0_i32_1 = arith.constant 0 : i32
    return %c0_i32, %c0_i32_0 : i32, i32
  }
  func.func @transform_5(%arg0: i32) -> (i32, i32) {
    %c0_i32 = arith.constant 0 : i32
    %c0_i32_0 = arith.constant 0 : i32
    %c0_i32_1 = arith.constant 0 : i32
    return %c0_i32, %c0_i32_0 : i32, i32
  }
  func.func @transform_6(%arg0: i32) -> (i32, i32) {
    %c0_i32 = arith.constant 0 : i32
    %c0_i32_0 = arith.constant 0 : i32
    %c0_i32_1 = arith.constant 0 : i32
    return %c0_i32, %c0_i32_0 : i32, i32
  }
  func.func @transform_7(%arg0: i32) -> (i32, i32) {
    %c0_i32 = arith.constant 0 : i32
    %c0_i32_0 = arith.constant 0 : i32
    return %arg0, %c0_i32 : i32, i32
  }
  func.func @transform_8(%arg0: i32) -> (i32, i32) {
    %c0_i32 = arith.constant 0 : i32
    %c0_i32_0 = arith.constant 0 : i32
    return %arg0, %c0_i32 : i32, i32
  }
}

</mosaic_0001>

<llo_original>
// kernel: rf_forward.11
$region0: #{rf_forward.11}
  #allocation0 [shape = 'u32[]', space=smem, size = 0x4, offset = 0x4, fixed_abs, tag = 'smem constant byte address 0x4 - core index']
  #allocation1 [shape = 'u32[144,128]{1,0:T(1,128)}', space=vmem, size = 0x12000, scoped, tag = 'internal scratch']
  %s0 = inlined_call_operand.vmem [shape: f32[8,128], index: 0, kind: input, shape index: {}]
  %s1 = inlined_call_operand.vmem [shape: f32[8,128], index: 1, kind: input, shape index: {}]
  %s2 = inlined_call_operand.vmem [shape: f32[8,128], index: 2, kind: input, shape index: {}]
  %s3 = inlined_call_operand.vmem [shape: f32[128,128], index: 3, kind: input, shape index: {}]
  %s4 = inlined_call_operand.vmem [shape: f32[128,128], index: 4, kind: input, shape index: {}]
  %s5 = inlined_call_operand.hbm [shape: f32[128,128], index: 5, kind: input, shape index: {}]
  %s6 = inlined_call_operand.vmem [shape: f32[1,128], index: 6, kind: input, shape index: {}]
  %s7 = inlined_call_operand.vmem [shape: f32[8,1], index: 7, kind: output, shape index: {0}]
  %s8 = inlined_call_operand.vmem [shape: f32[8,128], index: 8, kind: output, shape index: {1}]
  %9 = xla_tuple %s7, %s8
  %s10 = sld [smem:[#allocation0]]
  $region50: #{rf_forward.11} parent=0
    _
  %s12 = ssub.s32 1, %s10
  %s13 = scalar_select 0, %s12, %s10
  $region1: #{rf_forward.11} parent=0
    #allocation2 [shape = 'u8[65536]{0}', space=vmem, size = 0x10000, scoped, tag = 'input window, operand 5, single buffered']
    #allocation3 [shape = 's32[1]{0}', space=sflag, size = 0x4, scoped, tag = 'scoped memory for rf_forward.11']
    %14 = vsyncpa [#allocation3], 0
    // Predicated region
    $region2: #{rf_forward.11} parent=1 // pred_check
      _
    $region3: #{rf_forward.11} parent=1 // pred_check_branch
      %16 = sbr.rel (0) target = $region5
    $region4: #{rf_forward.11} parent=1 // pred_region
      _
    $region5: #{rf_forward.11} parent=1 // pred_fallthru
      _
    // Predicated region
    $region6: #{rf_forward.11} parent=1 // pred_check
      _
    $region7: #{rf_forward.11} parent=1 // pred_check_branch
      %18 = sbr.rel (0) target = $region9
    $region8: #{rf_forward.11} parent=1 // pred_region
      _
    $region9: #{rf_forward.11} parent=1 // pred_fallthru
      _
    // Predicated region
    $region10: #{rf_forward.11} parent=1 // pred_check
      _
    $region11: #{rf_forward.11} parent=1 // pred_check_branch
      %20 = sbr.rel (0) target = $region13
    $region12: #{rf_forward.11} parent=1 // pred_region
      _
    $region13: #{rf_forward.11} parent=1 // pred_fallthru
      _
    // Predicated region
    $region14: #{rf_forward.11} parent=1 // pred_check
      _
    $region15: #{rf_forward.11} parent=1 // pred_check_branch
      %22 = sbr.rel (0) target = $region17
    $region16: #{rf_forward.11} parent=1 // pred_region
      _
    $region17: #{rf_forward.11} parent=1 // pred_fallthru
      _
    // Predicated region
    $region18: #{rf_forward.11} parent=1 // pred_check
      _
    $region19: #{rf_forward.11} parent=1 // pred_check_branch
      %24 = sbr.rel (0) target = $region21
    $region20: #{rf_forward.11} parent=1 // pred_region
      _
    $region21: #{rf_forward.11} parent=1 // pred_fallthru
      _
    // Predicated region
    $region22: #{rf_forward.11} parent=1 // pred_check
      _
    $region23: #{rf_forward.11} parent=1 // pred_check_branch
      %26 = sbr.rel (0) target = $region25
    $region24: #{rf_forward.11} parent=1 // pred_region
      %s28 = ssub.s32 2048, 2048
      %29 = vsyncadd [#allocation3], %s28
      %s30 = sshll.u32 [#allocation2], 4
      %s31 = int_to_ptr.vmem [resolvable:$true] %s30
      %36 = dma.hbm_to_vmem [thread:$0]  %s5, 2048, %s31, [#allocation3], 128, 128, 8
    $region25: #{rf_forward.11} parent=1 // pred_fallthru
      _
    // Predicated region
    $region26: #{rf_forward.11} parent=1 // pred_check
      _
    $region27: #{rf_forward.11} parent=1 // pred_check_branch
      %38 = sbr.rel (0) target = $region29
    $region28: #{rf_forward.11} parent=1 // pred_region
      _
    $region29: #{rf_forward.11} parent=1 // pred_fallthru
      _
    // Predicated region
    $region30: #{rf_forward.11} parent=1 // pred_check
      _
    $region31: #{rf_forward.11} parent=1 // pred_check_branch
      %40 = sbr.rel (0) target = $region33
    $region32: #{rf_forward.11} parent=1 // pred_region
      %41 = dma.done [#allocation3], 2048
    $region33: #{rf_forward.11} parent=1 // pred_fallthru
      _
    %v42 = vld [vmem:[%s0] sm:$0xff]
    %v43 = vld [vmem:[%s1] sm:$0xff]
    %v44 = vsub.f32 %v43, %v42
    %v45 = vld [vmem:[%s2] sm:$0xff]
    %47 = vset.pattern.permute.xlu0 24
    %48 = vperm.xlu0 %47, %v45
    %v49 = vpop.permute.xlu0 %48
    %v51 = vmul.f32 %v49, %v44
    %v52 = vadd.f32 %v42, %v51
    %v53 = vld [vmem:[%s3] sm:$0xff]
    %v54 = vld [vmem:[%s3 + $0x8] sm:$0xff]
    %v55 = vld [vmem:[%s3 + $0x10] sm:$0xff]
    %v56 = vld [vmem:[%s3 + $0x18] sm:$0xff]
    %v57 = vld [vmem:[%s3 + $0x20] sm:$0xff]
    %v58 = vld [vmem:[%s3 + $0x28] sm:$0xff]
    %v59 = vld [vmem:[%s3 + $0x30] sm:$0xff]
    %v60 = vld [vmem:[%s3 + $0x38] sm:$0xff]
    %v61 = vld [vmem:[%s3 + $0x40] sm:$0xff]
    %v62 = vld [vmem:[%s3 + $0x48] sm:$0xff]
    %v63 = vld [vmem:[%s3 + $0x50] sm:$0xff]
    %v64 = vld [vmem:[%s3 + $0x58] sm:$0xff]
    %v65 = vld [vmem:[%s3 + $0x60] sm:$0xff]
    %v66 = vld [vmem:[%s3 + $0x68] sm:$0xff]
    %v67 = vld [vmem:[%s3 + $0x70] sm:$0xff]
    %v68 = vld [vmem:[%s3 + $0x78] sm:$0xff]
    %v69 = vld [vmem:[%s4] sm:$0xff]
    %v70 = vld [vmem:[%s4 + $0x8] sm:$0xff]
    %v71 = vld [vmem:[%s4 + $0x10] sm:$0xff]
    %v72 = vld [vmem:[%s4 + $0x18] sm:$0xff]
    %v73 = vld [vmem:[%s4 + $0x20] sm:$0xff]
    %v74 = vld [vmem:[%s4 + $0x28] sm:$0xff]
    %v75 = vld [vmem:[%s4 + $0x30] sm:$0xff]
    %v76 = vld [vmem:[%s4 + $0x38] sm:$0xff]
    %v77 = vld [vmem:[%s4 + $0x40] sm:$0xff]
    %v78 = vld [vmem:[%s4 + $0x48] sm:$0xff]
    %v79 = vld [vmem:[%s4 + $0x50] sm:$0xff]
    %v80 = vld [vmem:[%s4 + $0x58] sm:$0xff]
    %v81 = vld [vmem:[%s4 + $0x60] sm:$0xff]
    %v82 = vld [vmem:[%s4 + $0x68] sm:$0xff]
    %v83 = vld [vmem:[%s4 + $0x70] sm:$0xff]
    %v84 = vld [vmem:[%s4 + $0x78] sm:$0xff]
    %85 = vmatprep.subr.mxu0 0.0
    %86 = vmatpush1.msra.mxu0 %v69
    %87 = vmatprep.subr.mxu0 0.0
    %88 = vmatpush1.msra.mxu0 %v70
    %89 = vmatprep.subr.mxu0 0.0
    %90 = vmatpush1.msra.mxu0 %v71
    %91 = vmatprep.subr.mxu0 0.0
    %92 = vmatpush1.msra.mxu0 %v72
    %93 = vmatprep.subr.mxu0 0.0
    %94 = vmatpush1.msra.mxu0 %v73
    %95 = vmatprep.subr.mxu0 0.0
    %96 = vmatpush1.msra.mxu0 %v74
    %97 = vmatprep.subr.mxu0 0.0
    %98 = vmatpush1.msra.mxu0 %v75
    %99 = vmatprep.subr.mxu0 0.0
    %100 = vmatpush1.msra.mxu0 %v76
    %101 = vmatprep.subr.mxu0 0.0
    %102 = vmatpush1.msra.mxu0 %v77
    %103 = vmatprep.subr.mxu0 0.0
    %104 = vmatpush1.msra.mxu0 %v78
    %105 = vmatprep.subr.mxu0 0.0
    %106 = vmatpush1.msra.mxu0 %v79
    %107 = vmatprep.subr.mxu0 0.0
    %108 = vmatpush1.msra.mxu0 %v80
    %109 = vmatprep.subr.mxu0 0.0
    %110 = vmatpush1.msra.mxu0 %v81
    %111 = vmatprep.subr.mxu0 0.0
    %112 = vmatpush1.msra.mxu0 %v82
    %113 = vmatprep.subr.mxu0 0.0
    %114 = vmatpush1.msra.mxu0 %v83
    %115 = vmatprep.subr.mxu0 0.0
    %116 = vmatpush1.msra.mxu0 %v84
    %117 = vmatprep.subr.mxu0 0.0
    %118 = vmatpush1.msra.mxu0 0.0
    %119 = vmatprep.subr.mxu0 0.0
    %120 = vmatpush1.msra.mxu0 0.0
    %121 = vmatprep.subr.mxu0 0.0
    %122 = vmatpush1.msra.mxu0 0.0
    %123 = vmatprep.subr.mxu0 0.0
    %124 = vmatpush1.msra.mxu0 0.0
    %125 = vmatprep.subr.mxu0 0.0
    %126 = vmatpush1.msra.mxu0 0.0
    %127 = vmatprep.subr.mxu0 0.0
    %128 = vmatpush1.msra.mxu0 0.0
    %129 = vmatprep.subr.mxu0 0.0
    %130 = vmatpush1.msra.mxu0 0.0
    %131 = vmatprep.subr.mxu0 0.0
    %132 = vmatpush1.msra.mxu0 0.0
    %133 = vmatprep.subr.mxu0 0.0
    %134 = vmatpush1.msra.mxu0 0.0
    %135 = vmatprep.subr.mxu0 0.0
    %136 = vmatpush1.msra.mxu0 0.0
    %137 = vmatprep.subr.mxu0 0.0
    %138 = vmatpush1.msra.mxu0 0.0
    %139 = vmatprep.subr.mxu0 0.0
    %140 = vmatpush1.msra.mxu0 0.0
    %141 = vmatprep.subr.mxu0 0.0
    %142 = vmatpush1.msra.mxu0 0.0
    %143 = vmatprep.subr.mxu0 0.0
    %144 = vmatpush1.msra.mxu0 0.0
    %145 = vmatprep.subr.mxu0 0.0
    %146 = vmatpush1.msra.mxu0 0.0
    %147 = vmatprep.subr.mxu0 0.0
    %148 = vmatpush1.msra.mxu0 0.0
    %149 = vmatprep.mubr.f32.mxu0 0.0
    %150 = vmatmul.mubr.f32.gmra.mrb[0].mxu0 %v45
    %v151 = vpop.f32.mrb[0].mxu0
    %v152 = vadd.f32 0.0, %v151
    %v153 = vpop.f32.mrb[0].mxu0
    %154 = vdwg.mxu0
    %155 = vmatprep.subr.mxu0 0.0
    %156 = vmatpush1.msra.mxu0 %v53
    %157 = vmatprep.subr.mxu0 0.0
    %158 = vmatpush1.msra.mxu0 %v54
    %159 = vmatprep.subr.mxu0 0.0
    %160 = vmatpush1.msra.mxu0 %v55
    %161 = vmatprep.subr.mxu0 0.0
    %162 = vmatpush1.msra.mxu0 %v56
    %163 = vmatprep.subr.mxu0 0.0
    %164 = vmatpush1.msra.mxu0 %v57
    %165 = vmatprep.subr.mxu0 0.0
    %166 = vmatpush1.msra.mxu0 %v58
    %167 = vmatprep.subr.mxu0 0.0
    %168 = vmatpush1.msra.mxu0 %v59
    %169 = vmatprep.subr.mxu0 0.0
    %170 = vmatpush1.msra.mxu0 %v60
    %171 = vmatprep.subr.mxu0 0.0
    %172 = vmatpush1.msra.mxu0 %v61
    %173 = vmatprep.subr.mxu0 0.0
    %174 = vmatpush1.msra.mxu0 %v62
    %175 = vmatprep.subr.mxu0 0.0
    %176 = vmatpush1.msra.mxu0 %v63
    %177 = vmatprep.subr.mxu0 0.0
    %178 = vmatpush1.msra.mxu0 %v64
    %179 = vmatprep.subr.mxu0 0.0
    %180 = vmatpush1.msra.mxu0 %v65
    %181 = vmatprep.subr.mxu0 0.0
    %182 = vmatpush1.msra.mxu0 %v66
    %183 = vmatprep.subr.mxu0 0.0
    %184 = vmatpush1.msra.mxu0 %v67
    %185 = vmatprep.subr.mxu0 0.0
    %186 = vmatpush1.msra.mxu0 %v68
    %187 = vmatprep.subr.mxu0 0.0
    %188 = vmatpush1.msra.mxu0 0.0
    %189 = vmatprep.subr.mxu0 0.0
    %190 = vmatpush1.msra.mxu0 0.0
    %191 = vmatprep.subr.mxu0 0.0
    %192 = vmatpush1.msra.mxu0 0.0
    %193 = vmatprep.subr.mxu0 0.0
    %194 = vmatpush1.msra.mxu0 0.0
    %195 = vmatprep.subr.mxu0 0.0
    %196 = vmatpush1.msra.mxu0 0.0
    %197 = vmatprep.subr.mxu0 0.0
    %198 = vmatpush1.msra.mxu0 0.0
    %199 = vmatprep.subr.mxu0 0.0
    %200 = vmatpush1.msra.mxu0 0.0
    %201 = vmatprep.subr.mxu0 0.0
    %202 = vmatpush1.msra.mxu0 0.0
    %203 = vmatprep.subr.mxu0 0.0
    %204 = vmatpush1.msra.mxu0 0.0
    %205 = vmatprep.subr.mxu0 0.0
    %206 = vmatpush1.msra.mxu0 0.0
    %207 = vmatprep.subr.mxu0 0.0
    %208 = vmatpush1.msra.mxu0 0.0
    %209 = vmatprep.subr.mxu0 0.0
    %210 = vmatpush1.msra.mxu0 0.0
    %211 = vmatprep.subr.mxu0 0.0
    %212 = vmatpush1.msra.mxu0 0.0
    %213 = vmatprep.subr.mxu0 0.0
    %214 = vmatpush1.msra.mxu0 0.0
    %215 = vmatprep.subr.mxu0 0.0
    %216 = vmatpush1.msra.mxu0 0.0
    %217 = vmatprep.subr.mxu0 0.0
    %218 = vmatpush1.msra.mxu0 0.0
    %219 = vmatprep.mubr.f32.mxu0 0.0
    %220 = vmatmul.mubr.f32.gmra.mrb[0].mxu0 %v52
    %v221 = vpop.f32.mrb[0].mxu0
    %v222 = vadd.f32 %v152, %v221
    %v223 = vpop.f32.mrb[0].mxu0
    %224 = vdwg.mxu0
    %v225 = vtanh.pop %v222
    %v226 = vld [vmem:[#allocation2] sm:$0xff]
    %v227 = vld [vmem:[#allocation2 + $0x8] sm:$0xff]
    %v228 = vld [vmem:[#allocation2 + $0x10] sm:$0xff]
    %v229 = vld [vmem:[#allocation2 + $0x18] sm:$0xff]
    %v230 = vld [vmem:[#allocation2 + $0x20] sm:$0xff]
    %v231 = vld [vmem:[#allocation2 + $0x28] sm:$0xff]
    %v232 = vld [vmem:[#allocation2 + $0x30] sm:$0xff]
    %v233 = vld [vmem:[#allocation2 + $0x38] sm:$0xff]
    %v234 = vld [vmem:[#allocation2 + $0x40] sm:$0xff]
    %v235 = vld [vmem:[#allocation2 + $0x48] sm:$0xff]
    %v236 = vld [vmem:[#allocation2 + $0x50] sm:$0xff]
    %v237 = vld [vmem:[#allocation2 + $0x58] sm:$0xff]
    %v238 = vld [vmem:[#allocation2 + $0x60] sm:$0xff]
    %v239 = vld [vmem:[#allocation2 + $0x68] sm:$0xff]
    %v240 = vld [vmem:[#allocation2 + $0x70] sm:$0xff]
    %v241 = vld [vmem:[#allocation2 + $0x78] sm:$0xff]
    %v242 = vld [vmem:[%s6] sm:$0x1]
    %v244 = vlaneseq
    %v245 = vshrl.u32 %v244, 7
    %v246 = vsub.s32 0, %v245
    %v247 = vrot.slane %v242, %v246
    %249 = vmatprep.subr.mxu0 0.0
    %250 = vmatpush1.msra.mxu0 %v226
    %251 = vmatprep.subr.mxu0 0.0
    %252 = vmatpush1.msra.mxu0 %v227
    %253 = vmatprep.subr.mxu0 0.0
    %254 = vmatpush1.msra.mxu0 %v228
    %255 = vmatprep.subr.mxu0 0.0
    %256 = vmatpush1.msra.mxu0 %v229
    %257 = vmatprep.subr.mxu0 0.0
    %258 = vmatpush1.msra.mxu0 %v230
    %259 = vmatprep.subr.mxu0 0.0
    %260 = vmatpush1.msra.mxu0 %v231
    %261 = vmatprep.subr.mxu0 0.0
    %262 = vmatpush1.msra.mxu0 %v232
    %263 = vmatprep.subr.mxu0 0.0
    %264 = vmatpush1.msra.mxu0 %v233
    %265 = vmatprep.subr.mxu0 0.0
    %266 = vmatpush1.msra.mxu0 %v234
    %267 = vmatprep.subr.mxu0 0.0
    %268 = vmatpush1.msra.mxu0 %v235
    %269 = vmatprep.subr.mxu0 0.0
    %270 = vmatpush1.msra.mxu0 %v236
    %271 = vmatprep.subr.mxu0 0.0
    %272 = vmatpush1.msra.mxu0 %v237
    %273 = vmatprep.subr.mxu0 0.0
    %274 = vmatpush1.msra.mxu0 %v238
    %275 = vmatprep.subr.mxu0 0.0
    %276 = vmatpush1.msra.mxu0 %v239
    %277 = vmatprep.subr.mxu0 0.0
    %278 = vmatpush1.msra.mxu0 %v240
    %279 = vmatprep.subr.mxu0 0.0
    %280 = vmatpush1.msra.mxu0 %v241
    %281 = vmatprep.subr.mxu0 0.0
    %282 = vmatpush1.msra.mxu0 0.0
    %283 = vmatprep.subr.mxu0 0.0
    %284 = vmatpush1.msra.mxu0 0.0
    %285 = vmatprep.subr.mxu0 0.0
    %286 = vmatpush1.msra.mxu0 0.0
    %287 = vmatprep.subr.mxu0 0.0
    %288 = vmatpush1.msra.mxu0 0.0
    %289 = vmatprep.subr.mxu0 0.0
    %290 = vmatpush1.msra.mxu0 0.0
    %291 = vmatprep.subr.mxu0 0.0
    %292 = vmatpush1.msra.mxu0 0.0
    %293 = vmatprep.subr.mxu0 0.0
    %294 = vmatpush1.msra.mxu0 0.0
    %295 = vmatprep.subr.mxu0 0.0
    %296 = vmatpush1.msra.mxu0 0.0
    %297 = vmatprep.subr.mxu0 0.0
    %298 = vmatpush1.msra.mxu0 0.0
    %299 = vmatprep.subr.mxu0 0.0
    %300 = vmatpush1.msra.mxu0 0.0
    %301 = vmatprep.subr.mxu0 0.0
    %302 = vmatpush1.msra.mxu0 0.0
    %303 = vmatprep.subr.mxu0 0.0
    %304 = vmatpush1.msra.mxu0 0.0
    %305 = vmatprep.subr.mxu0 0.0
    %306 = vmatpush1.msra.mxu0 0.0
    %307 = vmatprep.subr.mxu0 0.0
    %308 = vmatpush1.msra.mxu0 0.0
    %309 = vmatprep.subr.mxu0 0.0
    %310 = vmatpush1.msra.mxu0 0.0
    %311 = vmatprep.subr.mxu0 0.0
    %312 = vmatpush1.msra.mxu0 0.0
    %313 = vmatprep.mubr.f32.mxu0 0.0
    %314 = vmatmul.mubr.f32.gmra.mrb[0].mxu0 %v225
    %v315 = vpop.f32.mrb[0].mxu0
    %v316 = vadd.f32 %v247, %v315
    %v317 = vpop.f32.mrb[0].mxu0
    %318 = vdwg.mxu0
    %319 = vst [vmem:[%s8] sm:$0xff] %v316
    %v320 = vsub.f32 %v44, %v316
    %v321 = vmul.f32 %v320, %v320
    %322 = vadd.xlane.f32.xlu0 %v321
    %v323 = vpop.xlane.xlu0 %322
    %v324 = vmul.f32 %v323, 0.03125
    %vm325 = vcmask 7168
    %326 = vst.msk [vmem:[%s7] sm:$0xff] %vm325, %v324
    // Predicated region
    $region34: #{rf_forward.11} parent=1 // pred_check
      _
    $region35: #{rf_forward.11} parent=1 // pred_check_branch
      %328 = sbr.rel (0) target = $region37
    $region36: #{rf_forward.11} parent=1 // pred_region
      _
    $region37: #{rf_forward.11} parent=1 // pred_fallthru
      _
    // Predicated region
    $region38: #{rf_forward.11} parent=1 // pred_check
      _
    $region39: #{rf_forward.11} parent=1 // pred_check_branch
      %330 = sbr.rel (0) target = $region41
    $region40: #{rf_forward.11} parent=1 // pred_region
      _
    $region41: #{rf_forward.11} parent=1 // pred_fallthru
      _
    // Predicated region
    $region42: #{rf_forward.11} parent=1 // pred_check
      _
    $region43: #{rf_forward.11} parent=1 // pred_check_branch
      %332 = sbr.rel (0) target = $region45
    $region44: #{rf_forward.11} parent=1 // pred_region
      _
    $region45: #{rf_forward.11} parent=1 // pred_fallthru
      _
    // Predicated region
    $region46: #{rf_forward.11} parent=1 // pred_check
      _
    $region47: #{rf_forward.11} parent=1 // pred_check_branch
      %334 = sbr.rel (0) target = $region49
    $region48: #{rf_forward.11} parent=1 // pred_region
      _
    $region49: #{rf_forward.11} parent=1 // pred_fallthru
      _
    %335 = vsyncpa [#allocation3], 1

</llo_original>
